<compile_context>
chip_gen: v7x
topology: tpu7x:2x2x1
jax: 0.10.0
libtpu: 0.0.40
codegen_flags: <defaults>
</compile_context>

<pallas_src>
import numpy as np
import jax
import jax.numpy as jnp
from jax import lax
from jax.experimental import pallas as pl
from jax.experimental.pallas import tpu as pltpu


_VMEM_WORKING_SET_BUDGET = 12 * 1024 * 1024   # in+out blocks, double-buffered
_VMEM_LIMIT_BYTES = 32 * 1024 * 1024          # explicit scoped-VMEM limit (safe on v5e/v6e/v7x)


def _build_haar_weights(channel_in: int) -> np.ndarray:
    """Same construction as HaarDownsampling.__init__ -> (4*C, 1, 2, 2).

    Only used by the reference check in __main__; the kernel itself uses the
    compile-time +/-1 butterfly.
    """
    w = np.ones((4, 1, 2, 2), dtype=np.float32)
    w[1, 0, 0, 1] = -1.0
    w[1, 0, 1, 1] = -1.0
    w[2, 0, 1, 0] = -1.0
    w[2, 0, 1, 1] = -1.0
    w[3, 0, 1, 0] = -1.0
    w[3, 0, 0, 1] = -1.0
    return np.concatenate([w] * channel_in, axis=0)


def _haar_kernel(x_ref, o_ref):
    # x_ref: VMEM (1, 4, tc, ts); x_ref[0, p, c, s] = patch element p of input
    #        channel c at flattened output pixel s, where the 2x2 patch is
    #        [[a, b], [c, d]] and p = 0:a, 1:b, 2:c, 3:d.
    # o_ref: VMEM (1, 4, tc, ts); o_ref[0, f, c, s] = Haar filter f applied to
    #        input channel c at flattened output pixel s.
    a = x_ref[0, 0].astype(jnp.float32)
    b = x_ref[0, 1].astype(jnp.float32)
    c = x_ref[0, 2].astype(jnp.float32)
    d = x_ref[0, 3].astype(jnp.float32)
    s1 = a + b
    d1 = a - b
    s2 = c + d
    d2 = c - d
    out_dtype = o_ref.dtype
    o_ref[0, 0] = ((s1 + s2) * 0.25).astype(out_dtype)   # filter [[1,  1], [ 1,  1]]
    o_ref[0, 1] = ((d1 + d2) * 0.25).astype(out_dtype)   # filter [[1, -1], [ 1, -1]]
    o_ref[0, 2] = ((s1 - s2) * 0.25).astype(out_dtype)   # filter [[1,  1], [-1, -1]]
    o_ref[0, 3] = ((d1 - d2) * 0.25).astype(out_dtype)   # filter [[1, -1], [-1,  1]]


def _pick_spatial_tile(S: int, max_elems: int) -> int:
    """Minor (lane) block dim: a multiple of 128 dividing S, or the full extent."""
    cands = [d for d in range(128, S + 1, 128) if S % d == 0]
    fitting = [d for d in cands if d <= max_elems]
    if fitting:
        return max(fitting)
    if cands:
        return min(cands)   # smallest lane-dense divisor (may exceed the soft budget)
    return S                # tiny / odd spatial extent: take the whole plane


def _pick_tiles(C: int, S: int, esize: int, budget: int):
    """Pick (tc, ts) so the double-buffered in+out working set stays ~<= budget."""
    per_elem = 16 * esize          # (in + out) * 4 patch slots * 2 buffers, bytes/elem
    tc_min = 8 if C % 8 == 0 else C   # second-to-minor dim: multiple of 8 or full C
    ts = _pick_spatial_tile(S, max(1, budget // (per_elem * tc_min)))
    # Grow the channel tile to use the remaining budget (fewer, larger DMAs).
    cap = max(tc_min, budget // (per_elem * ts))
    tc_cands = [d for d in range(8, C + 1, 8) if C % d == 0 and d <= cap]
    tc = max(tc_cands) if tc_cands else tc_min
    return tc, ts


def haar_downsampling(x: jax.Array) -> jax.Array:
    """Forward pass of HaarDownsampling (rev=False). x: NCHW array."""
    B, C, H, W = x.shape
    H2, W2 = H // 2, W // 2
    if (H % 2) or (W % 2):
        # Match F.conv2d(stride=2, VALID): the odd trailing row/col is dropped.
        x = x[:, :, : 2 * H2, : 2 * W2]
    S = H2 * W2

    # One XLA pass de-interleaving the 2x2 patches:
    #   xp[b, 2*di + dj, c, i*W2 + j] = x[b, c, 2*i + di, 2*j + dj]
    # TODO(synk): fold this de-interleave into the kernel once Mosaic supports
    # lane-strided loads / lane compaction; it is the remaining extra HBM pass.
    xp = (x.reshape(B, C, H2, 2, W2, 2)
           .transpose(0, 3, 5, 1, 2, 4)
           .reshape(B, 4, C, S))

    esize = jnp.dtype(x.dtype).itemsize
    tc, ts = _pick_tiles(C, S, esize, _VMEM_WORKING_SET_BUDGET)
    grid = (B, C // tc, S // ts)

    block = (1, 4, tc, ts)
    index_map = lambda b, ci, si: (b, 0, ci, si)

    out = pl.pallas_call(
        _haar_kernel,
        out_shape=jax.ShapeDtypeStruct((B, 4, C, S), x.dtype),
        grid_spec=pltpu.PrefetchScalarGridSpec(
            num_scalar_prefetch=0,
            grid=grid,
            in_specs=[pl.BlockSpec(block, index_map)],
            out_specs=pl.BlockSpec(block, index_map),
        ),
        compiler_params=pltpu.CompilerParams(
            dimension_semantics=("parallel", "parallel", "parallel"),
            vmem_limit_bytes=_VMEM_LIMIT_BYTES,
        ),
    )(xp)

    # Free reshape: (B, 4, C, H2*W2) -> (B, 4*C, H2, W2); channel order f*C + c
    # reproduces the module's reshape/transpose/reshape.
    return out.reshape(B, 4 * C, H2, W2)


if __name__ == "__main__":
    B, C, H, W = 2, 4, 16, 16
    key = jax.random.PRNGKey(0)
    x = jax.random.normal(key, (B, C, H, W), dtype=jnp.float32)

    out = jax.block_until_ready(haar_downsampling(x))

    # Independent reference: exactly F.conv2d(x, w, stride=2, groups=C)/4 + reshapes.
    w = jnp.asarray(_build_haar_weights(C))
    ref = lax.conv_general_dilated(
        x, w, window_strides=(2, 2), padding="VALID",
        dimension_numbers=("NCHW", "OIHW", "NCHW"),
        feature_group_count=C) / 4.0
    ref = ref.reshape(B, C, 4, H // 2, W // 2).transpose(0, 2, 1, 3, 4)
    ref = ref.reshape(B, 4 * C, H // 2, W // 2)

    assert out.shape == (B, 4 * C, H // 2, W // 2)
    assert out.dtype == x.dtype
    assert jnp.allclose(out, ref, atol=1e-5, rtol=1e-5)
    print("KERNEL_OK")
</pallas_src>

<mosaic_0001>
module attributes {stable_mosaic.version = 11 : i64} {
  func.func @_haar_kernel(%arg0: i32, %arg1: i32, %arg2: i32, %arg3: memref<1x4x4x64xf32, #tpu.memory_space<vmem>>, %arg4: memref<1x4x4x64xf32, #tpu.memory_space<vmem>>) attributes {dimension_semantics = [#tpu.dimension_semantics<parallel>, #tpu.dimension_semantics<parallel>, #tpu.dimension_semantics<parallel>], iteration_bounds = array<i64: 2, 1, 1>, scalar_prefetch = 0 : i64, scratch_operands = 0 : i64, tpu.core_type = #tpu.core_type<tc>, window_params = [{transform_indices = @transform_0, window_bounds = array<i64: 1, 4, 4, 64>}, {transform_indices = @transform_1, window_bounds = array<i64: 1, 4, 4, 64>}]} {
    %c0 = arith.constant 0 : index
    %c0_0 = arith.constant 0 : index
    %c0_1 = arith.constant 0 : index
    %c0_2 = arith.constant 0 : index
    %0 = vector.load %arg3[%c0, %c0_0, %c0_1, %c0_2] : memref<1x4x4x64xf32, #tpu.memory_space<vmem>>, vector<1x1x4x64xf32>
    %1 = vector.shape_cast %0 : vector<1x1x4x64xf32> to vector<4x64xf32>
    %c0_3 = arith.constant 0 : index
    %c1 = arith.constant 1 : index
    %c0_4 = arith.constant 0 : index
    %c0_5 = arith.constant 0 : index
    %2 = vector.load %arg3[%c0_3, %c1, %c0_4, %c0_5] : memref<1x4x4x64xf32, #tpu.memory_space<vmem>>, vector<1x1x4x64xf32>
    %3 = vector.shape_cast %2 : vector<1x1x4x64xf32> to vector<4x64xf32>
    %c0_6 = arith.constant 0 : index
    %c2 = arith.constant 2 : index
    %c0_7 = arith.constant 0 : index
    %c0_8 = arith.constant 0 : index
    %4 = vector.load %arg3[%c0_6, %c2, %c0_7, %c0_8] : memref<1x4x4x64xf32, #tpu.memory_space<vmem>>, vector<1x1x4x64xf32>
    %5 = vector.shape_cast %4 : vector<1x1x4x64xf32> to vector<4x64xf32>
    %c0_9 = arith.constant 0 : index
    %c3 = arith.constant 3 : index
    %c0_10 = arith.constant 0 : index
    %c0_11 = arith.constant 0 : index
    %6 = vector.load %arg3[%c0_9, %c3, %c0_10, %c0_11] : memref<1x4x4x64xf32, #tpu.memory_space<vmem>>, vector<1x1x4x64xf32>
    %7 = vector.shape_cast %6 : vector<1x1x4x64xf32> to vector<4x64xf32>
    %8 = arith.addf %1, %3 : vector<4x64xf32>
    %9 = arith.subf %1, %3 : vector<4x64xf32>
    %10 = arith.addf %5, %7 : vector<4x64xf32>
    %11 = arith.subf %5, %7 : vector<4x64xf32>
    %12 = arith.addf %8, %10 : vector<4x64xf32>
    %cst = arith.constant 2.500000e-01 : f32
    %13 = vector.broadcast %cst : f32 to vector<4x64xf32>
    %14 = arith.mulf %12, %13 : vector<4x64xf32>
    %c0_12 = arith.constant 0 : index
    %c0_13 = arith.constant 0 : index
    %c0_14 = arith.constant 0 : index
    %c0_15 = arith.constant 0 : index
    %15 = vector.load %arg4[%c0_12, %c0_13, %c0_14, %c0_15] : memref<1x4x4x64xf32, #tpu.memory_space<vmem>>, vector<1x1x4x64xf32>
    %16 = vector.shape_cast %15 : vector<1x1x4x64xf32> to vector<4x64xf32>
    %17 = vector.shape_cast %14 : vector<4x64xf32> to vector<1x1x4x64xf32>
    tpu.vector_store %arg4[%c0_12, %c0_13, %c0_14, %c0_15], %17 {strides = array<i32>} : memref<1x4x4x64xf32, #tpu.memory_space<vmem>>, vector<1x1x4x64xf32>,
    %18 = arith.addf %9, %11 : vector<4x64xf32>
    %cst_16 = arith.constant 2.500000e-01 : f32
    %19 = vector.broadcast %cst_16 : f32 to vector<4x64xf32>
    %20 = arith.mulf %18, %19 : vector<4x64xf32>
    %c0_17 = arith.constant 0 : index
    %c1_18 = arith.constant 1 : index
    %c0_19 = arith.constant 0 : index
    %c0_20 = arith.constant 0 : index
    %21 = vector.load %arg4[%c0_17, %c1_18, %c0_19, %c0_20] : memref<1x4x4x64xf32, #tpu.memory_space<vmem>>, vector<1x1x4x64xf32>
    %22 = vector.shape_cast %21 : vector<1x1x4x64xf32> to vector<4x64xf32>
    %23 = vector.shape_cast %20 : vector<4x64xf32> to vector<1x1x4x64xf32>
    tpu.vector_store %arg4[%c0_17, %c1_18, %c0_19, %c0_20], %23 {strides = array<i32>} : memref<1x4x4x64xf32, #tpu.memory_space<vmem>>, vector<1x1x4x64xf32>,
    %24 = arith.subf %8, %10 : vector<4x64xf32>
    %cst_21 = arith.constant 2.500000e-01 : f32
    %25 = vector.broadcast %cst_21 : f32 to vector<4x64xf32>
    %26 = arith.mulf %24, %25 : vector<4x64xf32>
    %c0_22 = arith.constant 0 : index
    %c2_23 = arith.constant 2 : index
    %c0_24 = arith.constant 0 : index
    %c0_25 = arith.constant 0 : index
    %27 = vector.load %arg4[%c0_22, %c2_23, %c0_24, %c0_25] : memref<1x4x4x64xf32, #tpu.memory_space<vmem>>, vector<1x1x4x64xf32>
    %28 = vector.shape_cast %27 : vector<1x1x4x64xf32> to vector<4x64xf32>
    %29 = vector.shape_cast %26 : vector<4x64xf32> to vector<1x1x4x64xf32>
    tpu.vector_store %arg4[%c0_22, %c2_23, %c0_24, %c0_25], %29 {strides = array<i32>} : memref<1x4x4x64xf32, #tpu.memory_space<vmem>>, vector<1x1x4x64xf32>,
    %30 = arith.subf %9, %11 : vector<4x64xf32>
    %cst_26 = arith.constant 2.500000e-01 : f32
    %31 = vector.broadcast %cst_26 : f32 to vector<4x64xf32>
    %32 = arith.mulf %30, %31 : vector<4x64xf32>
    %c0_27 = arith.constant 0 : index
    %c3_28 = arith.constant 3 : index
    %c0_29 = arith.constant 0 : index
    %c0_30 = arith.constant 0 : index
    %33 = vector.load %arg4[%c0_27, %c3_28, %c0_29, %c0_30] : memref<1x4x4x64xf32, #tpu.memory_space<vmem>>, vector<1x1x4x64xf32>
    %34 = vector.shape_cast %33 : vector<1x1x4x64xf32> to vector<4x64xf32>
    %35 = vector.shape_cast %32 : vector<4x64xf32> to vector<1x1x4x64xf32>
    tpu.vector_store %arg4[%c0_27, %c3_28, %c0_29, %c0_30], %35 {strides = array<i32>} : memref<1x4x4x64xf32, #tpu.memory_space<vmem>>, vector<1x1x4x64xf32>,
    return
  }
  func.func @transform_0(%arg0: i32, %arg1: i32, %arg2: i32) -> (i32, i32, i32, i32) {
    %c0_i32 = arith.constant 0 : i32
    %c0_i32_0 = arith.constant 0 : i32
    return %arg0, %c0_i32, %arg1, %arg2 : i32, i32, i32, i32
  }
  func.func @transform_1(%arg0: i32, %arg1: i32, %arg2: i32) -> (i32, i32, i32, i32) {
    %c0_i32 = arith.constant 0 : i32
    %c0_i32_0 = arith.constant 0 : i32
    return %arg0, %c0_i32, %arg1, %arg2 : i32, i32, i32, i32
  }
}

</mosaic_0001>

<llo_original>
// kernel: tpu_custom_call.1
$region0: #{tpu_custom_call.1}
  #allocation0 [shape = 'u32[]', space=smem, size = 0x4, offset = 0x4, fixed_abs, tag = 'smem constant byte address 0x4 - core index']
  #allocation1 [shape = 'u32[144,128]{1,0:T(1,128)}', space=vmem, size = 0x12000, scoped, tag = 'internal scratch']
  %s0 = inlined_call_operand.hbm [shape: f32[2,4,4,64], index: 0, kind: input, shape index: {}]
  %s1 = inlined_call_operand.hbm [shape: f32[2,4,4,64], index: 1, kind: output, shape index: {}]
  %s2 = sld [smem:[#allocation0]]
  $region41: #{tpu_custom_call.1} parent=0
    _
  %s4 = ssub.s32 1, %s2
  %s5 = scalar_select 0, %s4, %s2
  $region1: #{tpu_custom_call.1} parent=0
    #allocation2 [shape = 'u8[16384]{0}', space=vmem, size = 0x4000, scoped, tag = 'input window, operand 0']
    #allocation3 [shape = 's32[2]{0}', space=sflag, size = 0x8, scoped, tag = 'scoped memory for tpu_custom_call.1']
    #allocation4 [shape = 's32[2]{0}', space=sflag, size = 0x8, scoped, tag = 'scoped memory for tpu_custom_call.1']
    #allocation5 [shape = 'u8[16384]{0}', space=vmem, size = 0x4000, scoped, tag = 'output window, operand 0']
    %6 = vsyncpa [#allocation3], 0
    %s7 = scalar_lea.sflag [#allocation3], 1
    %8 = vsyncpa %s7, 0
    %9 = vsyncpa [#allocation4], 0
    %s10 = scalar_lea.sflag [#allocation4], 1
    %11 = vsyncpa %s10, 0
    loop: start=0, step=1, limit=4
    $region2: #{tpu_custom_call.1} parent=1 // loop_pre_header
      _
    $region3: #{tpu_custom_call.1} parent=1 // loop_header
      %s13 = sphi 0, %s17
      %p14 = scmp.ge.s32.totalorder %s13, 4
      %s20 = sphi 0, %s39
      %s21 = sphi 0, %s35
      %s22 = sphi 0, %s31
      %s23 = sphi 0, %s20
      %s24 = sphi 0, %s21
      %s25 = sphi 0, %s22
      %s26 = sphi 0, %s23
      %s27 = sphi 0, %s24
      %s28 = sphi 0, %s25
      %s46 = sphi 0, %s48
      %s49 = sphi 0, %s46
      %s50 = sphi 0, %s49
      %s66 = sphi 0, %s50
      %s76 = sphi 0, %s78
      %s79 = sphi 0, %s76
      %s80 = sphi 0, %s79
      %s96 = sphi 0, %s80
    $region4: #{tpu_custom_call.1} parent=1 // loop_header_branch
      %16 = sbr.rel (%p14) target = $region8
    $region5: #{tpu_custom_call.1} parent=1 // loop_body
      %s18 = ssub.s32 %s13, 1
      %s19 = ssub.s32 %s13, 2
      %s29 = sadd.s32 1, %s22
      %p30 = scmp.ge.s32.totalorder %s29, 1
      %s31 = scalar_select %p30, 0, %s29
      %s32 = sadd.s32 1, %s21
      %s33 = scalar_select %p30, %s32, %s21
      %p34 = scmp.ge.s32.totalorder %s33, 1
      %s35 = scalar_select %p34, 0, %s33
      %s36 = sadd.s32 1, %s20
      %s37 = scalar_select %p34, %s36, %s20
      %p38 = scmp.ge.s32.totalorder %s37, 2
      %s39 = scalar_select %p38, 0, %s37
      %s40 = ssub.s32 %s20, %s39
      %s41 = ssub.s32 %s21, %s35
      %s42 = sor.u32 %s40, %s41
      %s43 = ssub.s32 %s22, %s31
      %s44 = sor.u32 %s42, %s43
      %p45 = scmp.eq.s32.totalorder %s44, 0
      %s47 = sadd.s32 %s46, 1
      %s48 = scalar_select %p45, %s46, %s47
      %p51 = pneg %p45
      %p52 = scmp.eq.s32.totalorder %s13, 1
      %p53 = por %p51, %p52
      %p54 = scmp.ne.s32.totalorder %s46, %s49
      %p55 = scmp.eq.s32.totalorder %s13, 0
      %p56 = por %p54, %p55
      %p57 = scmp.ne.s32.totalorder %s46, %s49
      %p58 = scmp.eq.s32.totalorder %s18, 1
      %p59 = por %p57, %p58
      %p60 = scmp.ne.s32.totalorder %s49, %s50
      %p61 = scmp.eq.s32.totalorder %s18, 0
      %p62 = por %p60, %p61
      %p63 = scmp.ne.s32.totalorder %s49, %s50
      %p64 = scmp.eq.s32.totalorder %s19, 1
      %p65 = por %p63, %p64
      %p67 = scmp.ne.s32.totalorder %s50, %s66
      %p68 = scmp.eq.s32.totalorder %s19, 0
      %p69 = por %p67, %p68
      %s70 = ssub.s32 %s20, %s39
      %s71 = ssub.s32 %s21, %s35
      %s72 = sor.u32 %s70, %s71
      %s73 = ssub.s32 %s22, %s31
      %s74 = sor.u32 %s72, %s73
      %p75 = scmp.eq.s32.totalorder %s74, 0
      %s77 = sadd.s32 %s76, 1
      %s78 = scalar_select %p75, %s76, %s77
      %p81 = pneg %p75
      %p82 = scmp.eq.s32.totalorder %s13, 1
      %p83 = por %p81, %p82
      %p84 = scmp.ne.s32.totalorder %s76, %s79
      %p85 = scmp.eq.s32.totalorder %s13, 0
      %p86 = por %p84, %p85
      %p87 = scmp.ne.s32.totalorder %s76, %s79
      %p88 = scmp.eq.s32.totalorder %s18, 1
      %p89 = por %p87, %p88
      %p90 = scmp.ne.s32.totalorder %s79, %s80
      %p91 = scmp.eq.s32.totalorder %s18, 0
      %p92 = por %p90, %p91
      %p93 = scmp.ne.s32.totalorder %s79, %s80
      %p94 = scmp.eq.s32.totalorder %s19, 1
      %p95 = por %p93, %p94
      %p97 = scmp.ne.s32.totalorder %s80, %s96
      %p98 = scmp.eq.s32.totalorder %s19, 0
      %p99 = por %p97, %p98
      %p100 = scmp.le.s32.totalorder 1, %s13
      %p101 = scmp.lt.s32.totalorder %s13, 3
      %p102 = pnand %p100, %p101
      %p103 = pneg %p102
      // Predicated region
      $region9: #{tpu_custom_call.1} parent=5 // pred_check
        _
      $region10: #{tpu_custom_call.1} parent=5 // pred_check_branch
        %105 = sbr.rel (%p102) target = $region12
      $region11: #{tpu_custom_call.1} parent=5 // pred_region
        %s106 = ssub.s32 %s13, 1
      $region12: #{tpu_custom_call.1} parent=5 // pred_fallthru
        _
      %p107 = scmp.lt.s32.totalorder %s13, 2
      // Predicated region
      $region13: #{tpu_custom_call.1} parent=5 // pred_check
        %p108 = pneg %p107
      $region14: #{tpu_custom_call.1} parent=5 // pred_check_branch
        %110 = sbr.rel (%p108) target = $region16
      $region15: #{tpu_custom_call.1} parent=5 // pred_region
        // Predicated region
        $region17: #{tpu_custom_call.1} parent=15 // pred_check
          %p111 = pneg %p56
        $region18: #{tpu_custom_call.1} parent=15 // pred_check_branch
          %113 = sbr.rel (%p111) target = $region20
        $region19: #{tpu_custom_call.1} parent=15 // pred_region
          %s114 = sand.u32 %s46, 1
          %s115 = scalar_lea.sflag [#allocation3], %s114
          %s116 = sand.u32 %s46, 1
          %s117 = smul.addr %s116, 16
          %s118 = scalar_lea.vmem [#allocation2], %s117
          %s120 = ssub.s32 256, 256
          %121 = vsyncadd %s115, %s120
          %s122 = sadd.s32 %s22, %s21
          %s123 = smul.addr %s20, 4
          %s124 = sadd.s32 %s122, %s123
          %s125 = smul.addr %s124, 64
          %s126 = scalar_lea.hbm %s0, %s125
          %s127 = sshll.u32 %s118, 4
          %s128 = int_to_ptr.vmem [resolvable:$true] %s127
          %133 = dma.hbm_to_vmem [thread:$0]  %s126, 256, %s128, %s115, 64, 64, 4
        $region20: #{tpu_custom_call.1} parent=15 // pred_fallthru
          _
      $region16: #{tpu_custom_call.1} parent=5 // pred_fallthru
        _
      %p134 = scmp.le.s32.totalorder 1, %s13
      %p135 = scmp.lt.s32.totalorder %s13, 3
      %p136 = pnand %p134, %p135
      %p137 = pneg %p136
      // Predicated region
      $region21: #{tpu_custom_call.1} parent=5 // pred_check
        _
      $region22: #{tpu_custom_call.1} parent=5 // pred_check_branch
        %139 = sbr.rel (%p136) target = $region24
      $region23: #{tpu_custom_call.1} parent=5 // pred_region
        %s140 = ssub.s32 %s13, 1
        %s141 = sand.u32 %s49, 1
        %s142 = scalar_lea.sflag [#allocation3], %s141
        %s143 = sand.u32 %s49, 1
        %s144 = smul.addr %s143, 16
        %s145 = scalar_lea.vmem [#allocation2], %s144
        // Predicated region
        $region25: #{tpu_custom_call.1} parent=23 // pred_check
          %p146 = pneg %p62
        $region26: #{tpu_custom_call.1} parent=23 // pred_check_branch
          %148 = sbr.rel (%p146) target = $region28
        $region27: #{tpu_custom_call.1} parent=23 // pred_region
          %149 = dma.done %s142, 256
        $region28: #{tpu_custom_call.1} parent=23 // pred_fallthru
          _
        %s150 = sand.u32 %s49, 1
        %s151 = scalar_lea.sflag [#allocation3], %s150
        %s152 = sand.u32 %s49, 1
        %s153 = smul.addr %s152, 16
        %s154 = scalar_lea.vmem [#allocation2], %s153
        %p155 = pneg %p62
        %p156 = pneg %p59
        %p157 = pneg %p92
        %p158 = pneg %p89
        %s159 = sand.u32 %s79, 1
        %s160 = scalar_lea.sflag [#allocation4], %s159
        %s161 = sand.u32 %s79, 1
        %s162 = smul.addr %s161, 16
        %s163 = scalar_lea.vmem [#allocation5], %s162
        %v164 = vld [vmem:[%s145] sm:$0xf]
        %s165 = scalar_lea.vmem %s145, 4 [#allocation2]
        %v166 = vld [vmem:[%s165] sm:$0xf]
        %s167 = scalar_lea.vmem %s145, 8 [#allocation2]
        %v168 = vld [vmem:[%s167] sm:$0xf]
        %s169 = scalar_lea.vmem %s145, 12 [#allocation2]
        %v170 = vld [vmem:[%s169] sm:$0xf]
        %v171 = vadd.f32 %v164, %v166
        %v172 = vsub.f32 %v164, %v166
        %v173 = vadd.f32 %v168, %v170
        %v174 = vsub.f32 %v168, %v170
        %v175 = vadd.f32 %v171, %v173
        %v176 = vmul.f32 %v175, 0.25
        %vm177 = vcmask 519168
        %178 = vst.msk [vmem:[%s163] sm:$0xf] %vm177, %v176
        %v179 = vadd.f32 %v172, %v174
        %v180 = vmul.f32 %v179, 0.25
        %s181 = scalar_lea.vmem %s163, 4 [#allocation5]
        %182 = vst.msk [vmem:[%s181] sm:$0xf] %vm177, %v180
        %v183 = vsub.f32 %v171, %v173
        %v184 = vmul.f32 %v183, 0.25
        %s185 = scalar_lea.vmem %s163, 8 [#allocation5]
        %186 = vst.msk [vmem:[%s185] sm:$0xf] %vm177, %v184
        %v187 = vsub.f32 %v172, %v174
        %v188 = vmul.f32 %v187, 0.25
        %s189 = scalar_lea.vmem %s163, 12 [#allocation5]
        %190 = vst.msk [vmem:[%s189] sm:$0xf] %vm177, %v188
        %s191 = sand.u32 %s79, 1
        %s192 = scalar_lea.sflag [#allocation4], %s191
        %s193 = sand.u32 %s79, 1
        %s194 = smul.addr %s193, 16
        %s195 = scalar_lea.vmem [#allocation5], %s194
        // Predicated region
        $region29: #{tpu_custom_call.1} parent=23 // pred_check
          %p196 = pneg %p89
        $region30: #{tpu_custom_call.1} parent=23 // pred_check_branch
          %198 = sbr.rel (%p196) target = $region32
        $region31: #{tpu_custom_call.1} parent=23 // pred_region
          %s200 = ssub.s32 256, 256
          %201 = vsyncadd %s192, %s200
          %s202 = sadd.s32 %s25, %s24
          %s203 = smul.addr %s23, 4
          %s204 = sadd.s32 %s202, %s203
          %s205 = smul.addr %s204, 64
          %s206 = scalar_lea.hbm %s1, %s205
          %s207 = sshll.u32 %s195, 4
          %s208 = int_to_ptr.vmem [resolvable:$true] %s207
          %213 = dma.vmem_to_hbm [thread:$0]  %s208, 256, %s206, %s192, 64, 64, 4
        $region32: #{tpu_custom_call.1} parent=23 // pred_fallthru
          _
      $region24: #{tpu_custom_call.1} parent=5 // pred_fallthru
        _
      %p214 = scmp.le.s32.totalorder 2, %s13
      // Predicated region
      $region33: #{tpu_custom_call.1} parent=5 // pred_check
        %p215 = pneg %p214
      $region34: #{tpu_custom_call.1} parent=5 // pred_check_branch
        %217 = sbr.rel (%p215) target = $region36
      $region35: #{tpu_custom_call.1} parent=5 // pred_region
        %s218 = ssub.s32 %s13, 2
        // Predicated region
        $region37: #{tpu_custom_call.1} parent=35 // pred_check
          %p219 = pneg %p95
        $region38: #{tpu_custom_call.1} parent=35 // pred_check_branch
          %221 = sbr.rel (%p219) target = $region40
        $region39: #{tpu_custom_call.1} parent=35 // pred_region
          %s222 = sand.u32 %s80, 1
          %s223 = scalar_lea.sflag [#allocation4], %s222
          %s224 = sand.u32 %s80, 1
          %s225 = smul.addr %s224, 16
          %s226 = scalar_lea.vmem [#allocation5], %s225
          %227 = dma.done %s223, 256
        $region40: #{tpu_custom_call.1} parent=35 // pred_fallthru
          _
      $region36: #{tpu_custom_call.1} parent=5 // pred_fallthru
        _
    $region6: #{tpu_custom_call.1} parent=1 // loop_footer
      %s17 = sadd.s32 1, %s13
    $region7: #{tpu_custom_call.1} parent=1 // loop_footer_branch
      %12 = sbr.rel target = $region3
    $region8: #{tpu_custom_call.1} parent=1 // loop_exit
      _
    %228 = vsyncpa [#allocation3], 1
    %s229 = scalar_lea.sflag [#allocation3], 1
    %230 = vsyncpa %s229, 1
    %231 = vsyncpa [#allocation4], 1
    %s232 = scalar_lea.sflag [#allocation4], 1
    %233 = vsyncpa %s232, 1

</llo_original>
